<compile_context>
chip_gen: v6e
topology: v6e:2x2x1
jax: 0.10.0
libtpu: 0.0.40
codegen_flags: <defaults>
</compile_context>

<pallas_src>
import functools

import jax
import jax.numpy as jnp
import numpy as np
from jax import lax
from jax.experimental import pallas as pl
from jax.experimental.pallas import tpu as pltpu


def _round_up(x, m):
    return -(-x // m) * m


def _vmem_capacity_bytes():
    """Best-effort physical VMEM (per TensorCore); conservative fallback."""
    try:
        info = pltpu.get_tpu_info()
        for name in ("vmem_capacity_bytes", "vmem_size_bytes", "vmem_bytes"):
            val = getattr(info, name, None)
            if val:
                return int(val)
    except Exception:
        pass
    return 64 << 20          # v7x per-TC size: safe lower bound everywhere


def _is_v7():
    try:
        return "v7" in jax.devices()[0].device_kind.lower()
    except Exception:
        return False


def _attn_kernel(lens_ref,        # [Nb, 1]      int32
                 dproj_ref,       # [Nb, A]      f32  (h_dec @ W_dec.T + b, precomputed)
                 henc_ref,        # [Nb, Sp, He] stream dtype (bf16 or f32)
                 wenc_t_ref,      # [He, A]      stream dtype (W_enc pre-transposed)
                 v_ref,           # [1, A]       f32
                 ctx_ref,         # [Nb, He]     f32
                 wts_ref,         # [Nb, Sp]     f32
                 *, approx_recip, dot_precision):
    Nb, Sp, He = henc_ref.shape
    A = wenc_t_ref.shape[1]

    henc = henc_ref[...]                                             # [Nb, Sp, He]

    # Encoder projection as one MXU matmul over all Nb*Sp rows.  Sp % 8 == 0
    # (wrapper pads S), so both reshapes are layout no-ops.  bf16 x bf16 with
    # f32 accumulation when streaming bf16.
    enc_proj = jnp.dot(henc.reshape(Nb * Sp, He), wenc_t_ref[...],
                       preferred_element_type=jnp.float32,
                       precision=dot_precision)                      # [Nb*Sp, A] f32

    # tanh / softmax math stays in f32 (v5e has no bf16 VPU/EUP path).
    attn_out = jnp.tanh(enc_proj.reshape(Nb, Sp, A)
                        + dproj_ref[...][:, None, :])                 # [Nb, Sp, A] f32

    # score[n, s] = <attn_out[n, s, :], v>   (VPU multiply + lane reduce)
    score = jnp.sum(attn_out * v_ref[...][None, :, :], axis=-1)       # [Nb, Sp] f32

    # Masked softmax over the (padded) sequence dim, vectorized over the tile.
    idxs = lax.broadcasted_iota(jnp.int32, (Nb, Sp), 1)
    score = jnp.where(idxs < lens_ref[...], score, jnp.float32(-1e10))
    m = jnp.max(score, axis=-1, keepdims=True)
    e = jnp.exp(score - m)
    denom = jnp.sum(e, axis=-1, keepdims=True)
    weights = e * pl.reciprocal(denom, approx=approx_recip)           # [Nb, Sp] f32

    # ctx[n] = sum_s weights[n, s] * h_enc[n, s, :]
    # VPU multiply + sublane reduce instead of an M=1 batched MXU matmul.
    ctx = jnp.sum(weights[:, :, None] * henc.astype(jnp.float32), axis=1)  # [Nb, He]

    ctx_ref[...] = ctx
    wts_ref[...] = weights


def seq2seq_attention(h_dec, h_enc, src_lens, w, b, v, *,
                      stream_dtype=jnp.bfloat16, block_n=None,
                      dot_precision=None):
    """h_dec [N,Hd], h_enc [N,S,He], src_lens [N], w [A, Hd+He] (concat order =
    (h_dec, h_enc)), b [A], v [A].  Returns (ctx [N,He], weights [N,S]) in f32.

    stream_dtype: dtype used to stream h_enc / W_enc through HBM->VMEM->MXU
    (bf16 default for ~2x HBM bandwidth; use jnp.float32 for exact numerics).
    dot_precision: optional lax.Precision for the in-kernel encoder matmul
    (relevant only for the f32 stream at large He/A)."""
    h_dec = h_dec.astype(jnp.float32)
    N, Hd = h_dec.shape
    _, S, He = h_enc.shape
    A = w.shape[0]

    # ---- hoisted XLA prework -------------------------------------------------
    w_dec = w[:, :Hd].astype(jnp.float32)
    w_enc_t = jnp.transpose(w[:, Hd:]).astype(stream_dtype)          # [He, A]
    dec_proj = (jnp.dot(h_dec, w_dec.T, precision=lax.Precision.HIGHEST)
                + b.reshape(1, A)).astype(jnp.float32)               # [N, A]
    v_row = v.reshape(1, A).astype(jnp.float32)
    lens2 = src_lens.astype(jnp.int32).reshape(N, 1)

    # Pad S to a multiple of 8 so in-kernel reshapes are layout no-ops and all
    # sublane dims are 8-aligned.  Padded positions fall under the length mask.
    Sp = _round_up(S, 8)
    h_enc = h_enc.astype(stream_dtype)
    if Sp != S:
        h_enc = jnp.pad(h_enc, ((0, 0), (0, Sp - S), (0, 0)))

    # ---- VMEM accounting & block / grid selection ----------------------------
    sb = jnp.dtype(stream_dtype).itemsize
    lane = 128

    # Grid-constant tiles (double-buffered by the pipeline).
    resident = (_round_up(He, 8) * _round_up(A, lane) * sb            # W_enc^T
                + 8 * _round_up(A, lane) * 4) * 2                     # v row

    # Per-batch-row bytes: streamed inputs/outputs (x2 double buffer) plus the
    # f32 intermediates the kernel materialises.
    per_row = (Sp * _round_up(He, lane) * sb * 2                      # h_enc tile
               + _round_up(A, lane) * 4 * 2                           # dec_proj tile
               + lane * 4 * 2                                         # src_lens tile
               + _round_up(He, lane) * 4 * 2                          # ctx out tile
               + _round_up(Sp, lane) * 4 * 2                          # weights out tile
               + 2 * Sp * _round_up(A, lane) * 4                      # enc_proj + attn_out
               + 2 * Sp * _round_up(He, lane) * 4)                    # f32 upcast/product

    cap = _vmem_capacity_bytes()
    if _is_v7():
        cap = min(cap, 64 << 20)                 # per-TC, not per-chip
    nominal_limit = min(64 << 20, max(16 << 20, int(cap * 0.55)))
    hard_cap = min(96 << 20, max(nominal_limit, int(cap * 0.75)))
    budget = int(nominal_limit * 0.70) - resident   # headroom for compiler temps

    if block_n is None:
        if N <= 8:
            block_n = N
        else:
            rows = max(8, (max(budget, 0) // per_row // 8) * 8)
            # Keep >= 2 grid steps so a 2-TC chip (v7x) can split the batch axis.
            if N >= 16:
                rows = min(rows, _round_up(-(-N // 2), 8))
            block_n = int(min(rows, _round_up(N, 8)))
    else:
        block_n = int(min(block_n, N))
        if block_n != N:
            block_n = max(8, (block_n // 8) * 8)

    num_blocks = -(-N // block_n)
    Np = num_blocks * block_n

    # If even the minimum block busts the nominal budget, raise the scoped
    # limit (bounded by the hardware cap) rather than silently spilling.
    required = int((resident + per_row * block_n) / 0.70)
    vmem_limit = int(min(hard_cap, max(nominal_limit, required)))
    # TODO(synk): if `required` exceeds `hard_cap` (huge S*He rows), tile S
    # inside the kernel with an online softmax instead of growing block VMEM.

    if Np != N:
        pad = Np - N
        dec_proj = jnp.pad(dec_proj, ((0, pad), (0, 0)))
        h_enc = jnp.pad(h_enc, ((0, pad), (0, 0), (0, 0)))
        lens2 = jnp.pad(lens2, ((0, pad), (0, 0)))   # len 0 -> uniform wts, sliced off

    kernel = functools.partial(
        _attn_kernel,
        approx_recip=(jnp.dtype(stream_dtype) != jnp.dtype(jnp.float32)),
        dot_precision=dot_precision)

    grid_spec = pltpu.PrefetchScalarGridSpec(
        num_scalar_prefetch=0,
        grid=(num_blocks,),
        in_specs=[
            pl.BlockSpec((block_n, 1), lambda i: (i, 0)),             # src_lens
            pl.BlockSpec((block_n, A), lambda i: (i, 0)),             # dec_proj (f32)
            pl.BlockSpec((block_n, Sp, He), lambda i: (i, 0, 0)),     # h_enc (stream dtype)
            pl.BlockSpec((He, A), lambda i: (0, 0)),                  # W_enc^T (resident)
            pl.BlockSpec((1, A), lambda i: (0, 0)),                   # v       (resident)
        ],
        out_specs=[
            pl.BlockSpec((block_n, He), lambda i: (i, 0)),            # ctx
            pl.BlockSpec((block_n, Sp), lambda i: (i, 0)),            # weights
        ],
    )

    ctx, wts = pl.pallas_call(
        kernel,
        grid_spec=grid_spec,
        out_shape=(
            jax.ShapeDtypeStruct((Np, He), jnp.float32),
            jax.ShapeDtypeStruct((Np, Sp), jnp.float32),
        ),
        compiler_params=pltpu.CompilerParams(
            dimension_semantics=("parallel",),      # batch rows are independent
            vmem_limit_bytes=vmem_limit),
    )(lens2, dec_proj, h_enc, w_enc_t, v_row)

    return ctx[:N], wts[:N, :S]


def _reference(h_dec, h_enc, src_lens, w, b, v):
    N, S, He = h_enc.shape
    hd = jnp.repeat(h_dec[:, None, :], S, axis=1)
    attn_in = jnp.concatenate([hd, h_enc], axis=-1)
    attn_out = jnp.tanh(
        jnp.einsum('nsf,af->nsa', attn_in, w, precision=lax.Precision.HIGHEST) + b)
    score = jnp.einsum('a,nsa->ns', v, attn_out, precision=lax.Precision.HIGHEST)
    idxs = jnp.arange(S)[None, :]
    mask = idxs < src_lens[:, None]
    score = jnp.where(mask, score, -1e10)
    weights = jax.nn.softmax(score, axis=-1)
    ctx = jnp.einsum('ns,nse->ne', weights, h_enc, precision=lax.Precision.HIGHEST)
    return ctx, weights


if __name__ == "__main__":
    # small shapes: N=2, S=8, hs_enc=32, hs_dec=32, attn_size=32
    N, S, He, Hd, A = 2, 8, 32, 32, 32
    key = jax.random.PRNGKey(0)
    k1, k2, k3, k4, k5, _ = jax.random.split(key, 6)

    # deterministic parameter init (matches shapes / init style of the module)
    fan_in = He + Hd
    bound_w = float(np.sqrt(6.0 / fan_in))          # kaiming_uniform_ default
    bound_b = float(1.0 / np.sqrt(fan_in))          # nn.Linear default bias init
    w = jax.random.uniform(k1, (A, Hd + He), jnp.float32, -bound_w, bound_w)
    b = jax.random.uniform(k2, (A,), jnp.float32, -bound_b, bound_b)
    v = jax.random.normal(k3, (A,), jnp.float32)

    # example inputs
    h_dec = jax.random.normal(k4, (N, Hd), jnp.float32)
    h_enc = jax.random.normal(k5, (N, S, He), jnp.float32)
    src_lens = jnp.array([5, 8], dtype=jnp.int32)

    # 1) default bf16-streamed kernel vs a reference whose encoder-side
    #    operands are rounded identically (validates the kernel itself).
    ctx_b, wts_b = seq2seq_attention(h_dec, h_enc, src_lens, w, b, v)
    jax.block_until_ready((ctx_b, wts_b))
    h_enc_q = h_enc.astype(jnp.bfloat16).astype(jnp.float32)
    w_q = jnp.concatenate(
        [w[:, :Hd], w[:, Hd:].astype(jnp.bfloat16).astype(jnp.float32)], axis=1)
    ctx_r, wts_r = _reference(h_dec, h_enc_q, src_lens, w_q, b, v)
    assert np.allclose(np.asarray(ctx_b), np.asarray(ctx_r), atol=2e-3, rtol=2e-3)
    assert np.allclose(np.asarray(wts_b), np.asarray(wts_r), atol=2e-3, rtol=2e-3)

    # 2) exact f32-streamed mode vs the plain reference at tight tolerance.
    ctx_f, wts_f = seq2seq_attention(h_dec, h_enc, src_lens, w, b, v,
                                     stream_dtype=jnp.float32)
    jax.block_until_ready((ctx_f, wts_f))
    ctx_r2, wts_r2 = _reference(h_dec, h_enc, src_lens, w, b, v)
    assert np.allclose(np.asarray(ctx_f), np.asarray(ctx_r2), atol=1e-5, rtol=1e-5)
    assert np.allclose(np.asarray(wts_f), np.asarray(wts_r2), atol=1e-5, rtol=1e-5)

    print("KERNEL_OK")
</pallas_src>

<mosaic_0001>
module attributes {stable_mosaic.version = 11 : i64} {
  func.func @_attn_kernel(%arg0: i32, %arg1: memref<2x1xi32, #tpu.memory_space<vmem>>, %arg2: memref<2x32xf32, #tpu.memory_space<vmem>>, %arg3: memref<2x8x32xbf16, #tpu.memory_space<vmem>>, %arg4: memref<32x32xbf16, #tpu.memory_space<vmem>>, %arg5: memref<1x32xf32, #tpu.memory_space<vmem>>, %arg6: memref<2x32xf32, #tpu.memory_space<vmem>>, %arg7: memref<2x8xf32, #tpu.memory_space<vmem>>) attributes {dimension_semantics = [#tpu.dimension_semantics<parallel>], iteration_bounds = array<i64: 1>, scalar_prefetch = 0 : i64, scratch_operands = 0 : i64, tpu.core_type = #tpu.core_type<tc>, window_params = [{transform_indices = @transform_0, window_bounds = array<i64: 2, 1>}, {transform_indices = @transform_1, window_bounds = array<i64: 2, 32>}, {transform_indices = @transform_2, window_bounds = array<i64: 2, 8, 32>}, {pipeline_mode = #tpu.pipeline_mode<synchronous>, transform_indices = @transform_3, window_bounds = array<i64: 32, 32>}, {pipeline_mode = #tpu.pipeline_mode<synchronous>, transform_indices = @transform_4, window_bounds = array<i64: 1, 32>}, {transform_indices = @transform_5, window_bounds = array<i64: 2, 32>}, {transform_indices = @transform_6, window_bounds = array<i64: 2, 8>}]} {
    %c0 = arith.constant 0 : index
    %c0_0 = arith.constant 0 : index
    %c0_1 = arith.constant 0 : index
    %0 = vector.load %arg3[%c0, %c0_0, %c0_1] : memref<2x8x32xbf16, #tpu.memory_space<vmem>>, vector<2x8x32xbf16>
    %1 = vector.shape_cast %0 : vector<2x8x32xbf16> to vector<16x32xbf16>
    %c0_2 = arith.constant 0 : index
    %c0_3 = arith.constant 0 : index
    %2 = vector.load %arg4[%c0_2, %c0_3] : memref<32x32xbf16, #tpu.memory_space<vmem>>, vector<32x32xbf16>
    %cst = arith.constant dense<0.000000e+00> : vector<16x32xf32>
    %3 = tpu.matmul %1, %2, %cst {dimension_numbers = #tpu.dot_dimension_numbers<[1], [0], [0], [1], [0, 0, 1, 1], [], []>} : vector<16x32xbf16>, vector<32x32xbf16>, vector<16x32xf32> -> vector<16x32xf32>
    %4 = vector.shape_cast %3 : vector<16x32xf32> to vector<2x8x32xf32>
    %c0_4 = arith.constant 0 : index
    %c0_5 = arith.constant 0 : index
    %5 = vector.load %arg2[%c0_4, %c0_5] : memref<2x32xf32, #tpu.memory_space<vmem>>, vector<2x32xf32>
    %6 = vector.shape_cast %5 : vector<2x32xf32> to vector<2x1x32xf32>
    %7 = vector.broadcast %6 : vector<2x1x32xf32> to vector<2x8x32xf32>
    %8 = arith.addf %4, %7 : vector<2x8x32xf32>
    %9 = math.tanh %8 : vector<2x8x32xf32>
    %c0_6 = arith.constant 0 : index
    %c0_7 = arith.constant 0 : index
    %10 = vector.load %arg5[%c0_6, %c0_7] : memref<1x32xf32, #tpu.memory_space<vmem>>, vector<1x32xf32>
    %11 = vector.shape_cast %10 : vector<1x32xf32> to vector<1x1x32xf32>
    %12 = vector.broadcast %11 : vector<1x1x32xf32> to vector<2x8x32xf32>
    %13 = arith.mulf %9, %12 : vector<2x8x32xf32>
    %cst_8 = arith.constant dense<0.000000e+00> : vector<2x8xf32>
    %14 = vector.multi_reduction <add>, %13, %cst_8 [2] : vector<2x8x32xf32> to vector<2x8xf32>
    %15 = tpu.iota {dimensions = array<i32: 1>} : vector<2x8xi32>
    %c0_9 = arith.constant 0 : index
    %c0_10 = arith.constant 0 : index
    %16 = vector.load %arg1[%c0_9, %c0_10] : memref<2x1xi32, #tpu.memory_space<vmem>>, vector<2x1xi32>
    %17 = vector.broadcast %16 : vector<2x1xi32> to vector<2x8xi32>
    %18 = arith.cmpi slt, %15, %17 : vector<2x8xi32>
    %cst_11 = arith.constant -1.000000e+10 : f32
    %19 = vector.broadcast %cst_11 : f32 to vector<2x8xf32>
    %20 = arith.select %18, %14, %19 : vector<2x8xi1>, vector<2x8xf32>
    %cst_12 = arith.constant dense<0xFF800000> : vector<2xf32>
    %21 = vector.multi_reduction <maximumf>, %20, %cst_12 [1] : vector<2x8xf32> to vector<2xf32>
    %22 = vector.shape_cast %21 : vector<2xf32> to vector<2x1xf32>
    %23 = vector.broadcast %22 : vector<2x1xf32> to vector<2x8xf32>
    %24 = arith.subf %20, %23 : vector<2x8xf32>
    %25 = math.exp %24 : vector<2x8xf32>
    %cst_13 = arith.constant dense<0.000000e+00> : vector<2xf32>
    %26 = vector.multi_reduction <add>, %25, %cst_13 [1] : vector<2x8xf32> to vector<2xf32>
    %27 = vector.shape_cast %26 : vector<2xf32> to vector<2x1xf32>
    %28 = tpu.reciprocal %27 {approx = true} : vector<2x1xf32> -> vector<2x1xf32>
    %29 = vector.broadcast %28 : vector<2x1xf32> to vector<2x8xf32>
    %30 = arith.mulf %25, %29 : vector<2x8xf32>
    %31 = vector.shape_cast %30 : vector<2x8xf32> to vector<2x8x1xf32>
    %32 = arith.extf %0 : vector<2x8x32xbf16> to vector<2x8x32xf32>
    %33 = vector.broadcast %31 : vector<2x8x1xf32> to vector<2x8x32xf32>
    %34 = arith.mulf %33, %32 : vector<2x8x32xf32>
    %cst_14 = arith.constant dense<0.000000e+00> : vector<2x32xf32>
    %35 = vector.multi_reduction <add>, %34, %cst_14 [1] : vector<2x8x32xf32> to vector<2x32xf32>
    %c0_15 = arith.constant 0 : index
    %c0_16 = arith.constant 0 : index
    %36 = vector.load %arg6[%c0_15, %c0_16] : memref<2x32xf32, #tpu.memory_space<vmem>>, vector<2x32xf32>
    tpu.vector_store %arg6[%c0_15, %c0_16], %35 {strides = array<i32>} : memref<2x32xf32, #tpu.memory_space<vmem>>, vector<2x32xf32>,
    %c0_17 = arith.constant 0 : index
    %c0_18 = arith.constant 0 : index
    %37 = vector.load %arg7[%c0_17, %c0_18] : memref<2x8xf32, #tpu.memory_space<vmem>>, vector<2x8xf32>
    tpu.vector_store %arg7[%c0_17, %c0_18], %30 {strides = array<i32>} : memref<2x8xf32, #tpu.memory_space<vmem>>, vector<2x8xf32>,
    return
  }
  func.func @transform_0(%arg0: i32) -> (i32, i32) {
    %c0_i32 = arith.constant 0 : i32
    %c0_i32_0 = arith.constant 0 : i32
    return %arg0, %c0_i32 : i32, i32
  }
  func.func @transform_1(%arg0: i32) -> (i32, i32) {
    %c0_i32 = arith.constant 0 : i32
    %c0_i32_0 = arith.constant 0 : i32
    return %arg0, %c0_i32 : i32, i32
  }
  func.func @transform_2(%arg0: i32) -> (i32, i32, i32) {
    %c0_i32 = arith.constant 0 : i32
    %c0_i32_0 = arith.constant 0 : i32
    %c0_i32_1 = arith.constant 0 : i32
    return %arg0, %c0_i32, %c0_i32_0 : i32, i32, i32
  }
  func.func @transform_3(%arg0: i32) -> (i32, i32) {
    %c0_i32 = arith.constant 0 : i32
    %c0_i32_0 = arith.constant 0 : i32
    %c0_i32_1 = arith.constant 0 : i32
    return %c0_i32, %c0_i32_0 : i32, i32
  }
  func.func @transform_4(%arg0: i32) -> (i32, i32) {
    %c0_i32 = arith.constant 0 : i32
    %c0_i32_0 = arith.constant 0 : i32
    %c0_i32_1 = arith.constant 0 : i32
    return %c0_i32, %c0_i32_0 : i32, i32
  }
  func.func @transform_5(%arg0: i32) -> (i32, i32) {
    %c0_i32 = arith.constant 0 : i32
    %c0_i32_0 = arith.constant 0 : i32
    return %arg0, %c0_i32 : i32, i32
  }
  func.func @transform_6(%arg0: i32) -> (i32, i32) {
    %c0_i32 = arith.constant 0 : i32
    %c0_i32_0 = arith.constant 0 : i32
    return %arg0, %c0_i32 : i32, i32
  }
}

</mosaic_0001>

<llo_original>
// kernel: tpu_custom_call.1
$region0: #{tpu_custom_call.1}
  #allocation0 [shape = 'u32[]', space=smem, size = 0x4, offset = 0x4, fixed_abs, tag = 'smem constant byte address 0x4 - core index']
  #allocation1 [shape = 'u32[144,128]{1,0:T(1,128)}', space=vmem, size = 0x12000, scoped, tag = 'internal scratch']
  %s0 = inlined_call_operand.vmem [shape: s32[2,1], index: 0, kind: input, shape index: {}]
  %s1 = inlined_call_operand.vmem [shape: f32[2,32], index: 1, kind: input, shape index: {}]
  %s2 = inlined_call_operand.hbm [shape: bf16[2,8,32], index: 2, kind: input, shape index: {}]
  %s3 = inlined_call_operand.hbm [shape: bf16[32,32], index: 3, kind: input, shape index: {}]
  %s4 = inlined_call_operand.vmem [shape: f32[1,32], index: 4, kind: input, shape index: {}]
  %s5 = inlined_call_operand.hbm [shape: f32[2,32], index: 5, kind: output, shape index: {0}]
  %s6 = inlined_call_operand.hbm [shape: f32[2,8], index: 6, kind: output, shape index: {1}]
  %7 = xla_tuple %s5, %s6
  %s8 = sld [smem:[#allocation0]]
  $region46: #{tpu_custom_call.1} parent=0
    _
  %s10 = ssub.s32 1, %s8
  %s11 = scalar_select 0, %s10, %s8
  $region1: #{tpu_custom_call.1} parent=0
    #allocation2 [shape = 'u8[4096]{0}', space=vmem, size = 0x1000, scoped, tag = 'input window, operand 2, single buffered']
    #allocation3 [shape = 's32[1]{0}', space=sflag, size = 0x4, scoped, tag = 'scoped memory for tpu_custom_call.1']
    #allocation4 [shape = 's32[1]{0}', space=sflag, size = 0x4, scoped, tag = 'scoped memory for tpu_custom_call.1']
    #allocation5 [shape = 'u8[8192]{0}', space=vmem, size = 0x2000, scoped, tag = 'input window, operand 3, single buffered']
    #allocation6 [shape = 's32[1]{0}', space=sflag, size = 0x4, scoped, tag = 'scoped memory for tpu_custom_call.1']
    #allocation7 [shape = 'u8[1024]{0}', space=vmem, size = 0x400, scoped, tag = 'output window, operand 0, single buffered']
    #allocation8 [shape = 'u8[1024]{0}', space=vmem, size = 0x400, scoped, tag = 'output window, operand 1, single buffered']
    #allocation9 [shape = 's32[1]{0}', space=sflag, size = 0x4, scoped, tag = 'scoped memory for tpu_custom_call.1']
    %12 = vsyncpa [#allocation3], 0
    %13 = vsyncpa [#allocation6], 0
    %14 = vsyncpa [#allocation4], 0
    %15 = vsyncpa [#allocation9], 0
    // Predicated region
    $region2: #{tpu_custom_call.1} parent=1 // pred_check
      _
    $region3: #{tpu_custom_call.1} parent=1 // pred_check_branch
      %17 = sbr.rel (0) target = $region5
    $region4: #{tpu_custom_call.1} parent=1 // pred_region
      _
    $region5: #{tpu_custom_call.1} parent=1 // pred_fallthru
      _
    // Predicated region
    $region6: #{tpu_custom_call.1} parent=1 // pred_check
      _
    $region7: #{tpu_custom_call.1} parent=1 // pred_check_branch
      %19 = sbr.rel (0) target = $region9
    $region8: #{tpu_custom_call.1} parent=1 // pred_region
      _
    $region9: #{tpu_custom_call.1} parent=1 // pred_fallthru
      _
    // Predicated region
    $region10: #{tpu_custom_call.1} parent=1 // pred_check
      _
    $region11: #{tpu_custom_call.1} parent=1 // pred_check_branch
      %21 = sbr.rel (0) target = $region13
    $region12: #{tpu_custom_call.1} parent=1 // pred_region
      %s23 = ssub.s32 128, 128
      %24 = vsyncadd [#allocation3], %s23
      %s25 = sshll.u32 [#allocation2], 4
      %s26 = int_to_ptr.vmem [resolvable:$true] %s25
      %31 = dma.hbm_to_vmem [thread:$0]  %s2, 128, %s26, [#allocation3], 64, 64, 4
    $region13: #{tpu_custom_call.1} parent=1 // pred_fallthru
      _
    // Predicated region
    $region14: #{tpu_custom_call.1} parent=1 // pred_check
      _
    $region15: #{tpu_custom_call.1} parent=1 // pred_check_branch
      %33 = sbr.rel (0) target = $region17
    $region16: #{tpu_custom_call.1} parent=1 // pred_region
      %s35 = ssub.s32 256, 256
      %36 = vsyncadd [#allocation6], %s35
      %s37 = sshll.u32 [#allocation5], 4
      %s38 = int_to_ptr.vmem [resolvable:$true] %s37
      %43 = dma.hbm_to_vmem [thread:$0]  %s3, 256, %s38, [#allocation6], 64, 64, 4
    $region17: #{tpu_custom_call.1} parent=1 // pred_fallthru
      _
    // Predicated region
    $region18: #{tpu_custom_call.1} parent=1 // pred_check
      _
    $region19: #{tpu_custom_call.1} parent=1 // pred_check_branch
      %45 = sbr.rel (0) target = $region21
    $region20: #{tpu_custom_call.1} parent=1 // pred_region
      _
    $region21: #{tpu_custom_call.1} parent=1 // pred_fallthru
      _
    // Predicated region
    $region22: #{tpu_custom_call.1} parent=1 // pred_check
      _
    $region23: #{tpu_custom_call.1} parent=1 // pred_check_branch
      %47 = sbr.rel (0) target = $region25
    $region24: #{tpu_custom_call.1} parent=1 // pred_region
      %48 = dma.done [#allocation3], 128
    $region25: #{tpu_custom_call.1} parent=1 // pred_fallthru
      _
    // Predicated region
    $region26: #{tpu_custom_call.1} parent=1 // pred_check
      _
    $region27: #{tpu_custom_call.1} parent=1 // pred_check_branch
      %50 = sbr.rel (0) target = $region29
    $region28: #{tpu_custom_call.1} parent=1 // pred_region
      %51 = dma.done [#allocation6], 256
    $region29: #{tpu_custom_call.1} parent=1 // pred_fallthru
      _
    %v53 = vld [vmem:[#allocation2] sm:$0xf]
    %v54 = vld [vmem:[#allocation2 + $0x4] sm:$0xf]
    %v55 = vld [vmem:[#allocation5] sm:$0xf]
    %v56 = vld [vmem:[#allocation5 + $0x4] sm:$0xf]
    %v57 = vld [vmem:[#allocation5 + $0x8] sm:$0xf]
    %v58 = vld [vmem:[#allocation5 + $0xc] sm:$0xf]
    %v61 = vunpack.c.l.b16 %v53
    %v62 = vunpack.c.l.b16 %v54
    %v63 = vpack.c.b16 %v62, %v61
    %v68 = vunpack.c.l.b16 %v55
    %v69 = vunpack.c.l.b16 %v56
    %v70 = vunpack.c.l.b16 %v57
    %v71 = vunpack.c.l.b16 %v58
    %v72 = vpack.c.b16 %v69, %v68
    %v73 = vpack.c.b16 %v71, %v70
    %vm76 = vcmask 261120
    %v78 = vsel %vm76, %v63, 0
    %80 = vmatprep.subr.bf16.mxu0 0
    %81 = vmatpush1.bf16.msra.mxu0 0
    %82 = vmatprep.subr.bf16.mxu0 0
    %83 = vmatpush1.bf16.msra.mxu0 0
    %84 = vmatprep.subr.bf16.mxu0 0
    %85 = vmatpush1.bf16.msra.mxu0 0
    %86 = vmatprep.subr.bf16.mxu0 0
    %87 = vmatpush1.bf16.msra.mxu0 0
    %88 = vmatprep.subr.bf16.mxu0 0
    %89 = vmatpush1.bf16.msra.mxu0 0
    %90 = vmatprep.subr.bf16.mxu0 0
    %91 = vmatpush1.bf16.msra.mxu0 0
    %92 = vmatprep.subr.bf16.mxu0 0
    %93 = vmatpush1.bf16.msra.mxu0 %v73
    %94 = vmatprep.subr.bf16.mxu0 0
    %95 = vmatpush1.bf16.msra.mxu0 %v72
    %96 = vmatprep.subr.bf16.mxu0 0
    %97 = vmatpush2.bf16.msra.mxu0 0
    %98 = vmatprep.subr.bf16.mxu0 0
    %99 = vmatpush2.bf16.msra.mxu0 0
    %100 = vmatprep.subr.bf16.mxu0 0
    %101 = vmatpush2.bf16.msra.mxu0 0
    %102 = vmatprep.subr.bf16.mxu0 0
    %103 = vmatpush2.bf16.msra.mxu0 0
    %104 = vmatprep.subr.bf16.mxu0 0
    %105 = vmatpush2.bf16.msra.mxu0 0
    %106 = vmatprep.subr.bf16.mxu0 0
    %107 = vmatpush2.bf16.msra.mxu0 0
    %108 = vmatprep.subr.bf16.mxu0 0
    %109 = vmatpush2.bf16.msra.mxu0 0
    %110 = vmatprep.subr.bf16.mxu0 0
    %111 = vmatpush2.bf16.msra.mxu0 0
    %112 = vmatprep.mubr.bf16.mxu0 0
    %113 = vmatmul.mubr.bf16.gmra.mxu0 %v78
    %v114 = vpop.f32.mrf.mxu0
    %v115 = vadd.f32 0.0, %v114
    %v116 = vpop.f32.mrf.mxu0
    %v117 = vpop.f32.mrf.mxu0
    %v118 = vadd.f32 0.0, %v117
    %v119 = vpop.f32.mrf.mxu0
    %120 = vdwg.mxu0
    %v121 = vld [vmem:[%s1] sm:$0x3]
    %v124 = vunpack.c.l.s4 1966171168
    %v125 = vunpack.c.0.s8 %v124
    %v126 = vlaneseq
    %v127 = vshrl.u32 %v126, 7
    %v128 = vsub.s32 %v125, %v127
    %v129 = vrot.slane %v121, %v128
    %v130 = vcombine.high %v129, %v129
    %v132 = vunpack.c.l.s4 1966171168
    %v133 = vunpack.c.0.s8 %v132
    %v134 = vlaneseq
    %v135 = vshrl.u32 %v134, 7
    %v136 = vsub.s32 %v133, %v135
    %v137 = vrot.slane %v129, %v136
    %v139 = vunpack.c.l.s4 1966171168
    %v140 = vunpack.c.0.s8 %v139
    %v141 = vlaneseq
    %v142 = vshrl.u32 %v141, 7
    %v143 = vsub.s32 %v140, %v142
    %v144 = vrot.slane %v130, %v143
    %v145 = vlaneseq
    %v146 = vshrl.u32 %v145, 7
    %v147 = vsub.s32 0, %v146
    %v148 = vrot.slane %v137, %v147
    %v149 = vlaneseq
    %v150 = vshrl.u32 %v149, 7
    %v151 = vsub.s32 0, %v150
    %v152 = vrot.slane %v144, %v151
    %v155 = vadd.f32 %v115, %v148
    %v156 = vadd.f32 %v118, %v152
    %v157 = vtanh.pop %v155
    %v158 = vtanh.pop %v156
    %v159 = vld [vmem:[%s4] sm:$0x1]
    %v161 = vlaneseq
    %v162 = vshrl.u32 %v161, 7
    %v163 = vsub.s32 0, %v162
    %v164 = vrot.slane %v159, %v163
    %v166 = vmul.f32 %v157, %v164
    %v167 = vmul.f32 %v158, %v164
    %v168 = vsel %vm76, %v166, 0.0
    %169 = vadd.xlane.f32.xlu0 %v168
    %v170 = vpop.xlane.xlu0 %169
    %v171 = vsel %vm76, %v167, 0.0
    %172 = vadd.xlane.f32.xlu0 %v171
    %v173 = vpop.xlane.xlu0 %172
    %v174 = vlaneseq
    %v175 = vand.u32 %v174, 127
    %v176 = vld [vmem:[%s0] sm:$0x3]
    %177 = vset.pattern.permute.xlu0 0
    %178 = vperm.xlu0 %177, %v176
    %v179 = vpop.permute.xlu0 %178
    %vm180 = vcmp.lt.s32.totalorder %v175, %v179
    %v183 = vlaneseq
    %v184 = vshrl.u32 %v183, 7
    %v185 = vsub.s32 %v175, %v184
    %v186 = vrot.slane %v170, %v185
    %v187 = vlaneseq
    %v188 = vshrl.u32 %v187, 7
    %v189 = vsub.s32 %v175, %v188
    %v190 = vrot.slane %v173, %v189
    %vm191 = vcmask 1041409
    %v192 = vsel %vm191, %v190, %v186
    %v194 = vsel %vm180, %v192, -1e+10
    %vm195 = vcmask 58368
    %v196 = vsel %vm195, %v194, -inf
    %197 = vmax.xlane.f32.xlu0 %v196
    %v198 = vpop.xlane.xlu0 %197
    %v199 = vsub.f32 %v194, %v198
    %v200 = vmul.f32 %v199, 1.442695
    %v201 = vpow.pop %v200
    %v202 = vsel %vm195, %v201, 0.0
    %203 = vadd.xlane.f32.xlu0 %v202
    %v204 = vpop.xlane.xlu0 %203
    %v205 = vrcp.pop %v204
    %v206 = vmul.f32 %v201, %v205
    %v207 = vlaneseq
    %v208 = vshrl.u32 %v207, 7
    %v209 = vsub.s32 0, %v208
    %v210 = vrot.slane %v206, %v209
    %212 = vbcast.lane.b32.xlu0 %v210, 256
    %v213 = vpop.permute.xlu0 %212
    %v214 = vlaneseq
    %v215 = vshrl.u32 %v214, 7
    %v216 = vsub.s32 1, %v215
    %v217 = vrot.slane %v206, %v216
    %219 = vbcast.lane.b32.xlu0 %v217, 256
    %v220 = vpop.permute.xlu0 %219
    %v221 = vunpack.c.l.bf16 %v53
    %v222 = vunpack.c.l.bf16 %v54
    %v223 = vmul.f32 %v213, %v221
    %v224 = vmul.f32 %v220, %v222
    %v225 = vsel %vm76, %v223, 0.0
    %v226 = vrot.slane %v225, 4
    %v227 = vadd.f32 %v225, %v226
    %v228 = vrot.slane %v227, 2
    %v229 = vadd.f32 %v227, %v228
    %v230 = vrot.slane %v229, 1
    %v231 = vadd.f32 %v229, %v230
    %v232 = vsel %vm76, %v224, 0.0
    %v233 = vrot.slane %v232, 4
    %v234 = vadd.f32 %v232, %v233
    %v235 = vrot.slane %v234, 2
    %v236 = vadd.f32 %v234, %v235
    %v237 = vrot.slane %v236, 1
    %v238 = vadd.f32 %v236, %v237
    %v241 = vsel %vm191, %v238, %v231
    %vm243 = vcmask 254976
    %244 = vst.msk [vmem:[#allocation7] sm:$0x3] %vm243, %v241
    %245 = vst.msk [vmem:[#allocation8] sm:$0x3] %vm195, %v206
    // Predicated region
    $region30: #{tpu_custom_call.1} parent=1 // pred_check
      _
    $region31: #{tpu_custom_call.1} parent=1 // pred_check_branch
      %247 = sbr.rel (0) target = $region33
    $region32: #{tpu_custom_call.1} parent=1 // pred_region
      %s249 = ssub.s32 32, 32
      %250 = vsyncadd [#allocation4], %s249
      %s252 = sshll.u32 [#allocation7], 4
      %s253 = int_to_ptr.vmem [resolvable:$true] %s252
      %255 = dma.vmem_to_hbm [thread:$0]  %s253, 32, %s5, [#allocation4]
    $region33: #{tpu_custom_call.1} parent=1 // pred_fallthru
      _
    // Predicated region
    $region34: #{tpu_custom_call.1} parent=1 // pred_check
      _
    $region35: #{tpu_custom_call.1} parent=1 // pred_check_branch
      %257 = sbr.rel (0) target = $region37
    $region36: #{tpu_custom_call.1} parent=1 // pred_region
      %s259 = ssub.s32 32, 32
      %260 = vsyncadd [#allocation9], %s259
      %s262 = sshll.u32 [#allocation8], 4
      %s263 = int_to_ptr.vmem [resolvable:$true] %s262
      %265 = dma.vmem_to_hbm [thread:$0]  %s263, 32, %s6, [#allocation9]
    $region37: #{tpu_custom_call.1} parent=1 // pred_fallthru
      _
    // Predicated region
    $region38: #{tpu_custom_call.1} parent=1 // pred_check
      _
    $region39: #{tpu_custom_call.1} parent=1 // pred_check_branch
      %267 = sbr.rel (0) target = $region41
    $region40: #{tpu_custom_call.1} parent=1 // pred_region
      %268 = dma.done [#allocation4], 32
    $region41: #{tpu_custom_call.1} parent=1 // pred_fallthru
      _
    // Predicated region
    $region42: #{tpu_custom_call.1} parent=1 // pred_check
      _
    $region43: #{tpu_custom_call.1} parent=1 // pred_check_branch
      %270 = sbr.rel (0) target = $region45
    $region44: #{tpu_custom_call.1} parent=1 // pred_region
      %271 = dma.done [#allocation9], 32
    $region45: #{tpu_custom_call.1} parent=1 // pred_fallthru
      _
    %272 = vsyncpa [#allocation3], 1
    %273 = vsyncpa [#allocation6], 1
    %274 = vsyncpa [#allocation4], 1
    %275 = vsyncpa [#allocation9], 1

</llo_original>
